<compile_context>
chip_gen: v7x
topology: tpu7x:2x2x1
jax: 0.10.0
libtpu: 0.0.40
codegen_flags: <defaults>
</compile_context>

<pallas_src>
import functools

import jax
import jax.numpy as jnp
from jax.experimental import pallas as pl
from jax.experimental.pallas import tpu as pltpu


# ---------------------------------------------------------------------------
# Kernel 1: collapsed conv chain (one 3->64 matmul) + hardtanh + tanh,
# per pixel-column tile:  out(64, tp) = tanh(clip(Wc @ x(3, tp) + bc)),
# stored as bf16 for a cheaper HBM round-trip into the head.
# ---------------------------------------------------------------------------
def _conv_act_kernel(x_ref, wc_ref, bc_ref, o_ref):
    h = jnp.dot(wc_ref[...], x_ref[...], preferred_element_type=jnp.float32)
    h = h + bc_ref[...]
    h = jnp.clip(h, -1.0, 1.0)                   # hardtanh chain (idempotent)
    o_ref[...] = jnp.tanh(h).astype(o_ref.dtype)  # x5, streamed bf16


def conv_act(x_ncp, wc, bc, *, tp=8192):
    n, cin, hw = x_ncp.shape
    cout = wc.shape[0]
    tp = min(tp, hw)
    grid = (n, pl.cdiv(hw, tp))

    cost = pl.CostEstimate(
        flops=2 * n * hw * cin * cout,
        transcendentals=n * hw * cout,
        bytes_accessed=4 * n * cin * hw + 2 * n * cout * hw
        + 4 * (cin * cout + cout),
    )
    return pl.pallas_call(
        _conv_act_kernel,
        out_shape=jax.ShapeDtypeStruct((n, cout, hw), jnp.bfloat16),
        grid=grid,
        in_specs=[
            pl.BlockSpec((None, cin, tp), lambda b, t: (b, 0, t)),
            pl.BlockSpec((cout, cin), lambda b, t: (0, 0)),
            pl.BlockSpec((cout, 1), lambda b, t: (0, 0)),
        ],
        out_specs=pl.BlockSpec((None, cout, tp), lambda b, t: (b, 0, t)),
        compiler_params=pltpu.CompilerParams(
            dimension_semantics=("parallel", "parallel")),
        cost_estimate=cost,
    )(x_ncp, wc, bc)


# ---------------------------------------------------------------------------
# Kernel 2: linear1 partial sums, K-tiled over the flattened features.
# Grid = (nc, num_k_per): leading "parallel" axis splits the K reduction in
# two on v7x (both TensorCores stream lw1); each core accumulates into its own
# resident (N, 300) output block.  Tail masking only on the last global step.
# ---------------------------------------------------------------------------
def _head_partial_kernel(act_ref, lw1_ref, o_ref, *, feat, tk, num_k_per,
                         has_tail):
    c = pl.program_id(0)
    kk = pl.program_id(1)

    @pl.when(kk == 0)
    def _():
        o_ref[...] = jnp.zeros_like(o_ref)

    if not has_tail:
        o_ref[...] += jnp.dot(act_ref[...], lw1_ref[...],
                              preferred_element_type=jnp.float32)
    else:
        gk = c * num_k_per + kk
        total_k = pl.num_programs(0) * num_k_per
        is_tail = gk == total_k - 1

        @pl.when(gk < total_k - 1)
        def _():
            o_ref[...] += jnp.dot(act_ref[...], lw1_ref[...],
                                  preferred_element_type=jnp.float32)

        @pl.when(is_tail)
        def _():
            # Mask BOTH operands: the tail block's out-of-range VMEM lanes are
            # uninitialized, and 0*NaN would still poison the accumulator.
            valid = feat - gk * tk
            a_val = act_ref[...]
            w_val = lw1_ref[...]
            col = jax.lax.broadcasted_iota(jnp.int32, a_val.shape, 1)
            row = jax.lax.broadcasted_iota(jnp.int32, w_val.shape, 0)
            a_val = jnp.where(col < valid, a_val, jnp.zeros_like(a_val))
            w_val = jnp.where(row < valid, w_val, jnp.zeros_like(w_val))
            o_ref[...] += jnp.dot(a_val, w_val,
                                  preferred_element_type=jnp.float32)


def linear_head_partials(act_flat, lw1_bf, *, tk=8192):
    n, feat = act_flat.shape
    h1 = lw1_bf.shape[1]
    tk = min(tk, feat)
    if tk != feat:
        tk = max(128, (tk // 128) * 128)      # lane-aligned K tile
    num_k = pl.cdiv(feat, tk)
    has_tail = (feat % tk) != 0
    nc = 2 if (num_k % 2 == 0 and num_k >= 2) else 1   # v7x: use both cores
    num_k_per = num_k // nc

    kernel = functools.partial(_head_partial_kernel, feat=feat, tk=tk,
                               num_k_per=num_k_per, has_tail=has_tail)
    cost = pl.CostEstimate(
        flops=2 * n * feat * h1,
        transcendentals=0,
        bytes_accessed=2 * (n * feat + feat * h1) + 4 * nc * n * h1,
    )
    return pl.pallas_call(
        kernel,
        out_shape=jax.ShapeDtypeStruct((nc, n, h1), jnp.float32),
        grid=(nc, num_k_per),
        in_specs=[
            pl.BlockSpec((n, tk), lambda c, kk: (0, c * num_k_per + kk)),
            pl.BlockSpec((tk, h1), lambda c, kk: (c * num_k_per + kk, 0)),
        ],
        out_specs=pl.BlockSpec((None, n, h1), lambda c, kk: (c, 0, 0)),
        compiler_params=pltpu.CompilerParams(
            dimension_semantics=("parallel", "arbitrary"),
            vmem_limit_bytes=48 << 20),
        cost_estimate=cost,
    )(act_flat, lw1_bf)


# ---------------------------------------------------------------------------
# Kernel 3: tiny finalize — combine per-core partials, linear1 bias,
# tanh(tanh(.)), then linear2 as a lane reduction against a (1, 300) row.
# ---------------------------------------------------------------------------
def _head_finalize_kernel(part_ref, lb1_ref, lw2_ref, lb2_ref, o_ref):
    s = jnp.sum(part_ref[...], axis=0)                    # (n, 300) f32
    h = jnp.tanh(jnp.tanh(s + lb1_ref[...]))              # x95, x98
    o_ref[...] = (jnp.sum(h * lw2_ref[...], axis=-1, keepdims=True)
                  + lb2_ref[0, 0])                        # x119


def head_finalize(partials, lb1, lw2_row, lb2):
    nc, n, h1 = partials.shape
    return pl.pallas_call(
        _head_finalize_kernel,
        out_shape=jax.ShapeDtypeStruct((n, 1), jnp.float32),
        grid=(1,),
        in_specs=[
            pl.BlockSpec((nc, n, h1), lambda i: (0, 0, 0)),
            pl.BlockSpec((1, h1), lambda i: (0, 0)),
            pl.BlockSpec((1, h1), lambda i: (0, 0)),
            pl.BlockSpec(memory_space=pltpu.MemorySpace.SMEM),
        ],
        out_specs=pl.BlockSpec((n, 1), lambda i: (0, 0)),
    )(partials, lb1, lw2_row, lb2)


# ---------------------------------------------------------------------------
# Params + model wrapper
# ---------------------------------------------------------------------------
def init_params(key, feat_in):
    ks = jax.random.split(key, 10)

    def uniform(k, shape, fan_in):
        bound = 1.0 / jnp.sqrt(jnp.float32(fan_in))
        return jax.random.uniform(k, shape, jnp.float32, -bound, bound)

    return dict(
        # 1x1 conv weights stored (Cout, Cin), biases (Cout,)
        w1=uniform(ks[0], (24, 3), 3),      b1=uniform(ks[1], (24,), 3),
        w2=uniform(ks[2], (100, 24), 24),   b2=uniform(ks[3], (100,), 24),
        w3=uniform(ks[4], (64, 100), 100),  b3=uniform(ks[5], (64,), 100),
        # linear head (in_features = actual flattened width, see TODO above)
        lw1=uniform(ks[6], (feat_in, 300), feat_in),
        lb1=uniform(ks[7], (300,), feat_in),
        lw2=uniform(ks[8], (300, 1), 300),
        lb2=uniform(ks[9], (1,), 300),
    )


def model_tanh_forward(x_nchw, params, *, tp=8192, tk=8192):
    n, c, h, w = x_nchw.shape
    hw = h * w
    hdot = functools.partial(jnp.dot, precision=jax.lax.Precision.HIGHEST)

    # Collapse the purely-linear conv1->conv2->conv3 chain (exact algebra).
    wc = hdot(params["w3"], hdot(params["w2"], params["w1"]))             # (64, 3)
    bc = hdot(params["w3"], hdot(params["w2"], params["b1"]) + params["b2"]) \
        + params["b3"]                                                    # (64,)

    x_ncp = x_nchw.reshape(n, c, hw)               # free reshape, no transpose
    act = conv_act(x_ncp, wc, bc.reshape(-1, 1), tp=tp)        # (n,64,hw) bf16
    act_flat = act.reshape(n, 64 * hw)             # == torch Flatten(1,-1)

    lw1_bf = params["lw1"].astype(jnp.bfloat16)    # stream weights as bf16
    partials = linear_head_partials(act_flat, lw1_bf, tk=tk)   # (nc,n,300) f32
    return head_finalize(partials,
                         params["lb1"].reshape(1, -1),
                         params["lw2"].reshape(1, -1),         # (1, 300) row
                         params["lb2"].reshape(1, 1))


def reference_forward(x_nchw, params):
    """Pure-jnp f32 reference (per-layer convs, no collapse) for validation."""
    hdot = functools.partial(jnp.dot, precision=jax.lax.Precision.HIGHEST)
    n, c, h, w = x_nchw.shape
    t = x_nchw.reshape(n, c, h * w)

    def conv1x1(wt, b, z):
        return jnp.einsum("oc,ncp->nop", wt, z,
                          precision=jax.lax.Precision.HIGHEST) + b[None, :, None]

    t = conv1x1(params["w1"], params["b1"], t)
    t = conv1x1(params["w2"], params["b2"], t)
    t = conv1x1(params["w3"], params["b3"], t)
    act = jnp.tanh(jnp.clip(t, -1.0, 1.0))
    flat = act.reshape(n, -1)
    hh = jnp.tanh(jnp.tanh(hdot(flat, params["lw1"]) + params["lb1"][None, :]))
    return hdot(hh, params["lw2"]) + params["lb2"][None, :]


if __name__ == "__main__":
    key = jax.random.PRNGKey(0)
    k_x, k_p = jax.random.split(key)

    # Test 1: N=2, C=3, H=W=16 -> feat=16384; exercises the even-K dual-core
    # split (nc=2) with no tail masking.
    N, C, H, W = 2, 3, 16, 16
    x = jax.random.normal(k_x, (N, C, H, W), jnp.float32)
    params = init_params(k_p, feat_in=64 * H * W)

    out = jax.block_until_ready(model_tanh_forward(x, params))
    ref = jax.block_until_ready(reference_forward(x, params))
    assert out.shape == (N, 1), out.shape
    assert bool(jnp.all(jnp.isfinite(out)))
    assert bool(jnp.allclose(out, ref, rtol=5e-2, atol=1e-2)), (out, ref)

    # Test 2: H=W=9 -> feat=5184 with tk=2048 (num_k=3, tail=1088); exercises
    # the single-core path and the last-step masked tail.
    H2 = W2 = 9
    x2 = jax.random.normal(jax.random.PRNGKey(1), (N, C, H2, W2), jnp.float32)
    params2 = init_params(jax.random.PRNGKey(2), feat_in=64 * H2 * W2)
    out2 = jax.block_until_ready(model_tanh_forward(x2, params2, tk=2048))
    ref2 = jax.block_until_ready(reference_forward(x2, params2))
    assert out2.shape == (N, 1), out2.shape
    assert bool(jnp.all(jnp.isfinite(out2)))
    assert bool(jnp.allclose(out2, ref2, rtol=5e-2, atol=1e-2)), (out2, ref2)

    print("KERNEL_OK")
</pallas_src>

<mosaic_0001>
module attributes {stable_mosaic.version = 11 : i64} {
  func.func @_conv_act_kernel(%arg0: i32, %arg1: i32, %arg2: memref<1x3x256xf32, #tpu.memory_space<vmem>>, %arg3: memref<64x3xf32, #tpu.memory_space<vmem>>, %arg4: memref<64x1xf32, #tpu.memory_space<vmem>>, %arg5: memref<1x64x256xbf16, #tpu.memory_space<vmem>>) attributes {dimension_semantics = [#tpu.dimension_semantics<parallel>, #tpu.dimension_semantics<parallel>], iteration_bounds = array<i64: 2, 1>, scalar_prefetch = 0 : i64, scratch_operands = 0 : i64, tpu.core_type = #tpu.core_type<tc>, window_params = [{transform_indices = @transform_0, window_bounds = array<i64: 1, 3, 256>}, {pipeline_mode = #tpu.pipeline_mode<synchronous>, transform_indices = @transform_1, window_bounds = array<i64: 64, 3>}, {pipeline_mode = #tpu.pipeline_mode<synchronous>, transform_indices = @transform_2, window_bounds = array<i64: 64, 1>}, {transform_indices = @transform_3, window_bounds = array<i64: 1, 64, 256>}]} {
    %c0 = arith.constant 0 : index
    %c0_0 = arith.constant 0 : index
    %0 = vector.load %arg3[%c0, %c0_0] : memref<64x3xf32, #tpu.memory_space<vmem>>, vector<64x3xf32>
    %c0_1 = arith.constant 0 : index
    %c0_2 = arith.constant 0 : index
    %c0_3 = arith.constant 0 : index
    %1 = vector.load %arg2[%c0_1, %c0_2, %c0_3] : memref<1x3x256xf32, #tpu.memory_space<vmem>>, vector<1x3x256xf32>
    %2 = vector.shape_cast %1 : vector<1x3x256xf32> to vector<3x256xf32>
    %cst = arith.constant dense<0.000000e+00> : vector<64x256xf32>
    %3 = tpu.matmul %0, %2, %cst {dimension_numbers = #tpu.dot_dimension_numbers<[1], [0], [0], [1], [0, 0, 1, 1], [], []>} : vector<64x3xf32>, vector<3x256xf32>, vector<64x256xf32> -> vector<64x256xf32>
    %c0_4 = arith.constant 0 : index
    %c0_5 = arith.constant 0 : index
    %4 = vector.load %arg4[%c0_4, %c0_5] : memref<64x1xf32, #tpu.memory_space<vmem>>, vector<64x1xf32>
    %5 = vector.broadcast %4 : vector<64x1xf32> to vector<64x256xf32>
    %6 = arith.addf %3, %5 : vector<64x256xf32>
    %cst_6 = arith.constant -1.000000e+00 : f32
    %cst_7 = arith.constant 1.000000e+00 : f32
    %7 = vector.broadcast %cst_6 : f32 to vector<64x256xf32>
    %8 = arith.maximumf %7, %6 : vector<64x256xf32>
    %9 = vector.broadcast %cst_7 : f32 to vector<64x256xf32>
    %10 = arith.minimumf %9, %8 : vector<64x256xf32>
    %11 = math.tanh %10 : vector<64x256xf32>
    %12 = arith.truncf %11 : vector<64x256xf32> to vector<64x256xbf16>
    %c0_8 = arith.constant 0 : index
    %c0_9 = arith.constant 0 : index
    %c0_10 = arith.constant 0 : index
    %13 = vector.load %arg5[%c0_8, %c0_9, %c0_10] : memref<1x64x256xbf16, #tpu.memory_space<vmem>>, vector<1x64x256xbf16>
    %14 = vector.shape_cast %13 : vector<1x64x256xbf16> to vector<64x256xbf16>
    %15 = vector.shape_cast %12 : vector<64x256xbf16> to vector<1x64x256xbf16>
    tpu.vector_store %arg5[%c0_8, %c0_9, %c0_10], %15 {strides = array<i32>} : memref<1x64x256xbf16, #tpu.memory_space<vmem>>, vector<1x64x256xbf16>,
    return
  }
  func.func @transform_0(%arg0: i32, %arg1: i32) -> (i32, i32, i32) {
    %c0_i32 = arith.constant 0 : i32
    %c0_i32_0 = arith.constant 0 : i32
    return %arg0, %c0_i32, %arg1 : i32, i32, i32
  }
  func.func @transform_1(%arg0: i32, %arg1: i32) -> (i32, i32) {
    %c0_i32 = arith.constant 0 : i32
    %c0_i32_0 = arith.constant 0 : i32
    %c0_i32_1 = arith.constant 0 : i32
    return %c0_i32, %c0_i32_0 : i32, i32
  }
  func.func @transform_2(%arg0: i32, %arg1: i32) -> (i32, i32) {
    %c0_i32 = arith.constant 0 : i32
    %c0_i32_0 = arith.constant 0 : i32
    %c0_i32_1 = arith.constant 0 : i32
    return %c0_i32, %c0_i32_0 : i32, i32
  }
  func.func @transform_3(%arg0: i32, %arg1: i32) -> (i32, i32, i32) {
    %c0_i32 = arith.constant 0 : i32
    %c0_i32_0 = arith.constant 0 : i32
    return %arg0, %c0_i32, %arg1 : i32, i32, i32
  }
}

</mosaic_0001>

<llo_original>
// kernel: tpu_custom_call.1
$region0: #{tpu_custom_call.1}
  #allocation0 [shape = 'u32[]', space=smem, size = 0x4, offset = 0x4, fixed_abs, tag = 'smem constant byte address 0x4 - core index']
  #allocation1 [shape = 'u32[144,128]{1,0:T(1,128)}', space=vmem, size = 0x12000, scoped, tag = 'internal scratch']
  %s0 = inlined_call_operand.vmem [shape: f32[2,3,256], index: 0, kind: input, shape index: {}]
  %s1 = inlined_call_operand.vmem [shape: f32[64,3], index: 1, kind: input, shape index: {}]
  %s2 = inlined_call_operand.vmem [shape: f32[64,1], index: 2, kind: input, shape index: {}]
  %s3 = inlined_call_operand.hbm [shape: bf16[2,64,256], index: 3, kind: output, shape index: {}]
  %s4 = sld [smem:[#allocation0]]
  $region45: #{tpu_custom_call.1} parent=0
    _
  %s6 = ssub.s32 1, %s4
  %s7 = scalar_select 0, %s6, %s4
  $region1: #{tpu_custom_call.1} parent=0
    #allocation2 [shape = 'u8[65536]{0}', space=vmem, size = 0x10000, scoped, tag = 'output window, operand 0']
    #allocation3 [shape = 's32[2]{0}', space=sflag, size = 0x8, scoped, tag = 'scoped memory for tpu_custom_call.1']
    %8 = vsyncpa [#allocation3], 0
    %s9 = scalar_lea.sflag [#allocation3], 1
    %10 = vsyncpa %s9, 0
    loop: start=0, step=1, limit=4
    $region2: #{tpu_custom_call.1} parent=1 // loop_pre_header
      _
    $region3: #{tpu_custom_call.1} parent=1 // loop_header
      %s12 = sphi 0, %s16
      %p13 = scmp.ge.s32.totalorder %s12, 4
      %s19 = sphi 0, %s31
      %s20 = sphi 0, %s27
      %s21 = sphi 0, %s19
      %s22 = sphi 0, %s20
      %s23 = sphi 0, %s21
      %s24 = sphi 0, %s22
      %s36 = sphi 0, %s38
      %s39 = sphi 0, %s36
      %s40 = sphi 0, %s39
      %s56 = sphi 0, %s40
      %s60 = sphi 0, %s60
      %s62 = sphi 0, %s60
      %s63 = sphi 0, %s62
      %s77 = sphi 0, %s63
      %s81 = sphi 0, %s81
      %s83 = sphi 0, %s81
      %s84 = sphi 0, %s83
      %s98 = sphi 0, %s84
      %s106 = sphi 0, %s108
      %s109 = sphi 0, %s106
      %s110 = sphi 0, %s109
      %s126 = sphi 0, %s110
    $region4: #{tpu_custom_call.1} parent=1 // loop_header_branch
      %15 = sbr.rel (%p13) target = $region8
    $region5: #{tpu_custom_call.1} parent=1 // loop_body
      %s17 = ssub.s32 %s12, 1
      %s18 = ssub.s32 %s12, 2
      %s25 = sadd.s32 1, %s20
      %p26 = scmp.ge.s32.totalorder %s25, 1
      %s27 = scalar_select %p26, 0, %s25
      %s28 = sadd.s32 1, %s19
      %s29 = scalar_select %p26, %s28, %s19
      %p30 = scmp.ge.s32.totalorder %s29, 2
      %s31 = scalar_select %p30, 0, %s29
      %s32 = ssub.s32 %s19, %s31
      %s33 = ssub.s32 %s20, %s27
      %s34 = sor.u32 %s32, %s33
      %p35 = scmp.eq.s32.totalorder %s34, 0
      %s37 = sadd.s32 %s36, 1
      %s38 = scalar_select %p35, %s36, %s37
      %p41 = pneg %p35
      %p42 = scmp.eq.s32.totalorder %s12, 1
      %p43 = por %p41, %p42
      %p44 = scmp.ne.s32.totalorder %s36, %s39
      %p45 = scmp.eq.s32.totalorder %s12, 0
      %p46 = por %p44, %p45
      %p47 = scmp.ne.s32.totalorder %s36, %s39
      %p48 = scmp.eq.s32.totalorder %s17, 1
      %p49 = por %p47, %p48
      %p50 = scmp.ne.s32.totalorder %s39, %s40
      %p51 = scmp.eq.s32.totalorder %s17, 0
      %p52 = por %p50, %p51
      %p53 = scmp.ne.s32.totalorder %s39, %s40
      %p54 = scmp.eq.s32.totalorder %s18, 1
      %p55 = por %p53, %p54
      %p57 = scmp.ne.s32.totalorder %s40, %s56
      %p58 = scmp.eq.s32.totalorder %s18, 0
      %p59 = por %p57, %p58
      %s61 = sadd.s32 %s60, 1
      %p64 = scmp.eq.s32.totalorder %s12, 1
      %p65 = scmp.ne.s32.totalorder %s60, %s62
      %p66 = scmp.eq.s32.totalorder %s12, 0
      %p67 = por %p65, %p66
      %p68 = scmp.ne.s32.totalorder %s60, %s62
      %p69 = scmp.eq.s32.totalorder %s17, 1
      %p70 = por %p68, %p69
      %p71 = scmp.ne.s32.totalorder %s62, %s63
      %p72 = scmp.eq.s32.totalorder %s17, 0
      %p73 = por %p71, %p72
      %p74 = scmp.ne.s32.totalorder %s62, %s63
      %p75 = scmp.eq.s32.totalorder %s18, 1
      %p76 = por %p74, %p75
      %p78 = scmp.ne.s32.totalorder %s63, %s77
      %p79 = scmp.eq.s32.totalorder %s18, 0
      %p80 = por %p78, %p79
      %s82 = sadd.s32 %s81, 1
      %p85 = scmp.eq.s32.totalorder %s12, 1
      %p86 = scmp.ne.s32.totalorder %s81, %s83
      %p87 = scmp.eq.s32.totalorder %s12, 0
      %p88 = por %p86, %p87
      %p89 = scmp.ne.s32.totalorder %s81, %s83
      %p90 = scmp.eq.s32.totalorder %s17, 1
      %p91 = por %p89, %p90
      %p92 = scmp.ne.s32.totalorder %s83, %s84
      %p93 = scmp.eq.s32.totalorder %s17, 0
      %p94 = por %p92, %p93
      %p95 = scmp.ne.s32.totalorder %s83, %s84
      %p96 = scmp.eq.s32.totalorder %s18, 1
      %p97 = por %p95, %p96
      %p99 = scmp.ne.s32.totalorder %s84, %s98
      %p100 = scmp.eq.s32.totalorder %s18, 0
      %p101 = por %p99, %p100
      %s102 = ssub.s32 %s19, %s31
      %s103 = ssub.s32 %s20, %s27
      %s104 = sor.u32 %s102, %s103
      %p105 = scmp.eq.s32.totalorder %s104, 0
      %s107 = sadd.s32 %s106, 1
      %s108 = scalar_select %p105, %s106, %s107
      %p111 = pneg %p105
      %p112 = scmp.eq.s32.totalorder %s12, 1
      %p113 = por %p111, %p112
      %p114 = scmp.ne.s32.totalorder %s106, %s109
      %p115 = scmp.eq.s32.totalorder %s12, 0
      %p116 = por %p114, %p115
      %p117 = scmp.ne.s32.totalorder %s106, %s109
      %p118 = scmp.eq.s32.totalorder %s17, 1
      %p119 = por %p117, %p118
      %p120 = scmp.ne.s32.totalorder %s109, %s110
      %p121 = scmp.eq.s32.totalorder %s17, 0
      %p122 = por %p120, %p121
      %p123 = scmp.ne.s32.totalorder %s109, %s110
      %p124 = scmp.eq.s32.totalorder %s18, 1
      %p125 = por %p123, %p124
      %p127 = scmp.ne.s32.totalorder %s110, %s126
      %p128 = scmp.eq.s32.totalorder %s18, 0
      %p129 = por %p127, %p128
      %p130 = scmp.le.s32.totalorder 1, %s12
      %p131 = scmp.lt.s32.totalorder %s12, 3
      %p132 = pnand %p130, %p131
      %p133 = pneg %p132
      // Predicated region
      $region9: #{tpu_custom_call.1} parent=5 // pred_check
        _
      $region10: #{tpu_custom_call.1} parent=5 // pred_check_branch
        %135 = sbr.rel (%p132) target = $region12
      $region11: #{tpu_custom_call.1} parent=5 // pred_region
        %s136 = ssub.s32 %s12, 1
        // Predicated region
        $region13: #{tpu_custom_call.1} parent=11 // pred_check
          %p137 = pneg %p73
        $region14: #{tpu_custom_call.1} parent=11 // pred_check_branch
          %139 = sbr.rel (%p137) target = $region16
        $region15: #{tpu_custom_call.1} parent=11 // pred_region
          _
        $region16: #{tpu_custom_call.1} parent=11 // pred_fallthru
          _
        // Predicated region
        $region17: #{tpu_custom_call.1} parent=11 // pred_check
          %p140 = pneg %p94
        $region18: #{tpu_custom_call.1} parent=11 // pred_check_branch
          %142 = sbr.rel (%p140) target = $region20
        $region19: #{tpu_custom_call.1} parent=11 // pred_region
          _
        $region20: #{tpu_custom_call.1} parent=11 // pred_fallthru
          _
      $region12: #{tpu_custom_call.1} parent=5 // pred_fallthru
        _
      %p143 = scmp.lt.s32.totalorder %s12, 2
      // Predicated region
      $region21: #{tpu_custom_call.1} parent=5 // pred_check
        %p144 = pneg %p143
      $region22: #{tpu_custom_call.1} parent=5 // pred_check_branch
        %146 = sbr.rel (%p144) target = $region24
      $region23: #{tpu_custom_call.1} parent=5 // pred_region
        // Predicated region
        $region25: #{tpu_custom_call.1} parent=23 // pred_check
          %p147 = pneg %p46
        $region26: #{tpu_custom_call.1} parent=23 // pred_check_branch
          %149 = sbr.rel (%p147) target = $region28
        $region27: #{tpu_custom_call.1} parent=23 // pred_region
          %s150 = smul.u32 2, %s20
          %p151 = scmp.lt.s32.totalorder %s19, 1
          %s152 = scalar_select %p151, %s19, 1
          %p153 = scmp.lt.s32.totalorder %s150, 1
          %s154 = scalar_select %p153, %s150, 1
          %s155 = smul.addr %s152, 2
          %s156 = sadd.s32 %s154, %s155
          %s157 = smul.addr %s156, 4
          %s158 = scalar_lea.vmem %s0, %s157
          %s159 = smul.u32 2, %s20
        $region28: #{tpu_custom_call.1} parent=23 // pred_fallthru
          _
      $region24: #{tpu_custom_call.1} parent=5 // pred_fallthru
        _
      %p160 = scmp.le.s32.totalorder 1, %s12
      %p161 = scmp.lt.s32.totalorder %s12, 3
      %p162 = pnand %p160, %p161
      %p163 = pneg %p162
      // Predicated region
      $region29: #{tpu_custom_call.1} parent=5 // pred_check
        _
      $region30: #{tpu_custom_call.1} parent=5 // pred_check_branch
        %165 = sbr.rel (%p162) target = $region32
      $region31: #{tpu_custom_call.1} parent=5 // pred_region
        %s166 = ssub.s32 %s12, 1
        %s167 = smul.u32 2, %s22
        %p168 = scmp.lt.s32.totalorder %s21, 1
        %s169 = scalar_select %p168, %s21, 1
        %p170 = scmp.lt.s32.totalorder %s167, 1
        %s171 = scalar_select %p170, %s167, 1
        %s172 = smul.addr %s169, 2
        %s173 = sadd.s32 %s171, %s172
        %s174 = smul.addr %s173, 4
        %s175 = scalar_lea.vmem %s0, %s174
        %p176 = pneg %p52
        %p177 = pneg %p49
        %p178 = pneg %p73
        %p179 = pneg %p70
        %p180 = pneg %p94
        %p181 = pneg %p91
        %p182 = pneg %p122
        %p183 = pneg %p119
        %s184 = sand.u32 %s109, 1
        %s185 = scalar_lea.sflag [#allocation3], %s184
        %s186 = sand.u32 %s109, 1
        %s187 = smul.addr %s186, 64
        %s188 = scalar_lea.vmem [#allocation2], %s187
        %s189 = smul.u32 2, %s22
        %p190 = scmp.lt.s32.totalorder %s21, 1
        %s191 = scalar_select %p190, %s21, 1
        %p192 = scmp.lt.s32.totalorder %s189, 1
        %s193 = scalar_select %p192, %s189, 1
        %s194 = smul.addr %s191, 2
        %s195 = sadd.s32 %s193, %s194
        %s196 = smul.addr %s195, 4
        %s197 = scalar_lea.vmem %s0, %s196
        %s198 = smul.u32 2, %s22
        %s199 = smul.u32 2, %s22
        %v200 = vld [vmem:[%s1] sm:$0xff]
        %v201 = vld [vmem:[%s1 + $0x8] sm:$0xff]
        %v202 = vld [vmem:[%s1 + $0x10] sm:$0xff]
        %v203 = vld [vmem:[%s1 + $0x18] sm:$0xff]
        %v204 = vld [vmem:[%s1 + $0x20] sm:$0xff]
        %v205 = vld [vmem:[%s1 + $0x28] sm:$0xff]
        %v206 = vld [vmem:[%s1 + $0x30] sm:$0xff]
        %v207 = vld [vmem:[%s1 + $0x38] sm:$0xff]
        %v208 = vld [vmem:[%s197] sm:$0x77]
        %v209 = vld [vmem:[%s2] sm:$0xff]
        %v210 = vld [vmem:[%s2 + $0x8] sm:$0xff]
        %v211 = vld [vmem:[%s2 + $0x10] sm:$0xff]
        %v212 = vld [vmem:[%s2 + $0x18] sm:$0xff]
        %v213 = vld [vmem:[%s2 + $0x20] sm:$0xff]
        %v214 = vld [vmem:[%s2 + $0x28] sm:$0xff]
        %v215 = vld [vmem:[%s2 + $0x30] sm:$0xff]
        %v216 = vld [vmem:[%s2 + $0x38] sm:$0xff]
        %218 = vset.pattern.permute.xlu0 0
        %219 = vperm.xlu0 %218, %v209
        %v220 = vpop.permute.xlu0 %219
        %223 = vset.pattern.permute.xlu0 0
        %224 = vperm.xlu0 %223, %v210
        %v225 = vpop.permute.xlu0 %224
        %228 = vset.pattern.permute.xlu0 0
        %229 = vperm.xlu0 %228, %v211
        %v230 = vpop.permute.xlu0 %229
        %233 = vset.pattern.permute.xlu0 0
        %234 = vperm.xlu0 %233, %v212
        %v235 = vpop.permute.xlu0 %234
        %238 = vset.pattern.permute.xlu0 0
        %239 = vperm.xlu0 %238, %v213
        %v240 = vpop.permute.xlu0 %239
        %243 = vset.pattern.permute.xlu0 0
        %244 = vperm.xlu0 %243, %v214
        %v245 = vpop.permute.xlu0 %244
        %248 = vset.pattern.permute.xlu0 0
        %249 = vperm.xlu0 %248, %v215
        %v250 = vpop.permute.xlu0 %249
        %253 = vset.pattern.permute.xlu0 0
        %254 = vperm.xlu0 %253, %v216
        %v255 = vpop.permute.xlu0 %254
        %v258 = vcombine.high %v208, %v208
        %vm259 = vcmask 23552
        %v261 = vsel %vm259, %v200, 0
        %v264 = vsel %vm259, %v201, 0
        %v267 = vsel %vm259, %v202, 0
        %v270 = vsel %vm259, %v203, 0
        %v273 = vsel %vm259, %v204, 0
        %v276 = vsel %vm259, %v205, 0
        %v279 = vsel %vm259, %v206, 0
        %v282 = vsel %vm259, %v207, 0
        %vm284 = vcmask 1042432
        %v285 = vsel %vm284, %v208, 0
        %v287 = vsel %vm284, %v258, 0
        %289 = vmatprep.subr.mxu0 %v287
        %290 = vmatpush1.msra.mxu0 %v285
        %291 = vmatprep.subr.mxu0 0.0
        %292 = vmatpush1.msra.mxu0 0.0
        %293 = vmatprep.subr.mxu0 0.0
        %294 = vmatpush1.msra.mxu0 0.0
        %295 = vmatprep.subr.mxu0 0.0
        %296 = vmatpush1.msra.mxu0 0.0
        %297 = vmatprep.subr.mxu0 0.0
        %298 = vmatpush1.msra.mxu0 0.0
        %299 = vmatprep.subr.mxu0 0.0
        %300 = vmatpush1.msra.mxu0 0.0
        %301 = vmatprep.subr.mxu0 0.0
        %302 = vmatpush1.msra.mxu0 0.0
        %303 = vmatprep.subr.mxu0 0.0
        %304 = vmatpush1.msra.mxu0 0.0
        %305 = vmatprep.subr.mxu0 0.0
        %306 = vmatpush1.msra.mxu0 0.0
        %307 = vmatprep.subr.mxu0 0.0
        %308 = vmatpush1.msra.mxu0 0.0
        %309 = vmatprep.subr.mxu0 0.0
        %310 = vmatpush1.msra.mxu0 0.0
        %311 = vmatprep.subr.mxu0 0.0
        %312 = vmatpush1.msra.mxu0 0.0
        %313 = vmatprep.subr.mxu0 0.0
        %314 = vmatpush1.msra.mxu0 0.0
        %315 = vmatprep.subr.mxu0 0.0
        %316 = vmatpush1.msra.mxu0 0.0
        %317 = vmatprep.subr.mxu0 0.0
        %318 = vmatpush1.msra.mxu0 0.0
        %319 = vmatprep.subr.mxu0 0.0
        %320 = vmatpush1.msra.mxu0 0.0
        %321 = vmatprep.subr.mxu0 0.0
        %322 = vmatpush1.msra.mxu0 0.0
        %323 = vmatprep.subr.mxu0 0.0
        %324 = vmatpush1.msra.mxu0 0.0
        %325 = vmatprep.subr.mxu0 0.0
        %326 = vmatpush1.msra.mxu0 0.0
        %327 = vmatprep.subr.mxu0 0.0
        %328 = vmatpush1.msra.mxu0 0.0
        %329 = vmatprep.subr.mxu0 0.0
        %330 = vmatpush1.msra.mxu0 0.0
        %331 = vmatprep.subr.mxu0 0.0
        %332 = vmatpush1.msra.mxu0 0.0
        %333 = vmatprep.subr.mxu0 0.0
        %334 = vmatpush1.msra.mxu0 0.0
        %335 = vmatprep.subr.mxu0 0.0
        %336 = vmatpush1.msra.mxu0 0.0
        %337 = vmatprep.subr.mxu0 0.0
        %338 = vmatpush1.msra.mxu0 0.0
        %339 = vmatprep.subr.mxu0 0.0
        %340 = vmatpush1.msra.mxu0 0.0
        %341 = vmatprep.subr.mxu0 0.0
        %342 = vmatpush1.msra.mxu0 0.0
        %343 = vmatprep.subr.mxu0 0.0
        %344 = vmatpush1.msra.mxu0 0.0
        %345 = vmatprep.subr.mxu0 0.0
        %346 = vmatpush1.msra.mxu0 0.0
        %347 = vmatprep.subr.mxu0 0.0
        %348 = vmatpush1.msra.mxu0 0.0
        %349 = vmatprep.subr.mxu0 0.0
        %350 = vmatpush1.msra.mxu0 0.0
        %351 = vmatprep.subr.mxu0 0.0
        %352 = vmatpush1.msra.mxu0 0.0
        %353 = vmatprep.mubr.f32.mxu0 0.0
        %354 = vmatmul.mubr.f32.gmra.mrb[0].mxu0 %v261
        %v355 = vpop.f32.mrb[0].mxu0
        %v356 = vadd.f32 %v220, %v355
        %v357 = vpop.f32.mrb[0].mxu0
        %v358 = vadd.f32 %v220, %v357
        %359 = vmatprep.mubr.f32.mxu0 0.0
        %360 = vmatmul.mubr.f32.gmra.mrb[0].mxu0 %v264
        %v361 = vpop.f32.mrb[0].mxu0
        %v362 = vadd.f32 %v225, %v361
        %v363 = vpop.f32.mrb[0].mxu0
        %v364 = vadd.f32 %v225, %v363
        %365 = vmatprep.mubr.f32.mxu0 0.0
        %366 = vmatmul.mubr.f32.gmra.mrb[0].mxu0 %v267
        %v367 = vpop.f32.mrb[0].mxu0
        %v368 = vadd.f32 %v230, %v367
        %v369 = vpop.f32.mrb[0].mxu0
        %v370 = vadd.f32 %v230, %v369
        %371 = vmatprep.mubr.f32.mxu0 0.0
        %372 = vmatmul.mubr.f32.gmra.mrb[0].mxu0 %v270
        %v373 = vpop.f32.mrb[0].mxu0
        %v374 = vadd.f32 %v235, %v373
        %v375 = vpop.f32.mrb[0].mxu0
        %v376 = vadd.f32 %v235, %v375
        %377 = vmatprep.mubr.f32.mxu0 0.0
        %378 = vmatmul.mubr.f32.gmra.mrb[0].mxu0 %v273
        %v379 = vpop.f32.mrb[0].mxu0
        %v380 = vadd.f32 %v240, %v379
        %v381 = vpop.f32.mrb[0].mxu0
        %v382 = vadd.f32 %v240, %v381
        %383 = vmatprep.mubr.f32.mxu0 0.0
        %384 = vmatmul.mubr.f32.gmra.mrb[0].mxu0 %v276
        %v385 = vpop.f32.mrb[0].mxu0
        %v386 = vadd.f32 %v245, %v385
        %v387 = vpop.f32.mrb[0].mxu0
        %v388 = vadd.f32 %v245, %v387
        %389 = vmatprep.mubr.f32.mxu0 0.0
        %390 = vmatmul.mubr.f32.gmra.mrb[0].mxu0 %v279
        %v391 = vpop.f32.mrb[0].mxu0
        %v392 = vadd.f32 %v250, %v391
        %v393 = vpop.f32.mrb[0].mxu0
        %v394 = vadd.f32 %v250, %v393
        %395 = vmatprep.mubr.f32.mxu0 0.0
        %396 = vmatmul.mubr.f32.gmra.mrb[0].mxu0 %v282
        %v397 = vpop.f32.mrb[0].mxu0
        %v398 = vadd.f32 %v255, %v397
        %v399 = vpop.f32.mrb[0].mxu0
        %v400 = vadd.f32 %v255, %v399
        %401 = vdwg.mxu0
        %v402 = vmax.f32 %v356, -1.0
        %v403 = vmax.f32 %v358, -1.0
        %v404 = vmax.f32 %v362, -1.0
        %v405 = vmax.f32 %v364, -1.0
        %v406 = vmax.f32 %v368, -1.0
        %v407 = vmax.f32 %v370, -1.0
        %v408 = vmax.f32 %v374, -1.0
        %v409 = vmax.f32 %v376, -1.0
        %v410 = vmax.f32 %v380, -1.0
        %v411 = vmax.f32 %v382, -1.0
        %v412 = vmax.f32 %v386, -1.0
        %v413 = vmax.f32 %v388, -1.0
        %v414 = vmax.f32 %v392, -1.0
        %v415 = vmax.f32 %v394, -1.0
        %v416 = vmax.f32 %v398, -1.0
        %v417 = vmax.f32 %v400, -1.0
        %v418 = vmin.f32 %v402, 1.0
        %v419 = vmin.f32 %v403, 1.0
        %v420 = vmin.f32 %v404, 1.0
        %v421 = vmin.f32 %v405, 1.0
        %v422 = vmin.f32 %v406, 1.0
        %v423 = vmin.f32 %v407, 1.0
        %v424 = vmin.f32 %v408, 1.0
        %v425 = vmin.f32 %v409, 1.0
        %v426 = vmin.f32 %v410, 1.0
        %v427 = vmin.f32 %v411, 1.0
        %v428 = vmin.f32 %v412, 1.0
        %v429 = vmin.f32 %v413, 1.0
        %v430 = vmin.f32 %v414, 1.0
        %v431 = vmin.f32 %v415, 1.0
        %v432 = vmin.f32 %v416, 1.0
        %v433 = vmin.f32 %v417, 1.0
        %v434 = vtanh.pop %v418
        %v435 = vtanh.pop %v419
        %v436 = vtanh.pop %v420
        %v437 = vtanh.pop %v421
        %v438 = vtanh.pop %v422
        %v439 = vtanh.pop %v423
        %v440 = vtanh.pop %v424
        %v441 = vtanh.pop %v425
        %v442 = vtanh.pop %v426
        %v443 = vtanh.pop %v427
        %v444 = vtanh.pop %v428
        %v445 = vtanh.pop %v429
        %v446 = vtanh.pop %v430
        %v447 = vtanh.pop %v431
        %v448 = vtanh.pop %v432
        %v449 = vtanh.pop %v433
        %v450 = vpack.c.bf16 %v436, %v434
        %v451 = vpack.c.bf16 %v437, %v435
        %v452 = vpack.c.bf16 %v440, %v438
        %v453 = vpack.c.bf16 %v441, %v439
        %v454 = vpack.c.bf16 %v444, %v442
        %v455 = vpack.c.bf16 %v445, %v443
        %v456 = vpack.c.bf16 %v448, %v446
        %v457 = vpack.c.bf16 %v449, %v447
        %v466 = vunpack.c.l.b16 %v450
        %v467 = vunpack.c.l.b16 %v451
        %v468 = vunpack.c.h.b16 %v450
        %v469 = vunpack.c.h.b16 %v451
        %v470 = vunpack.c.l.b16 %v452
        %v471 = vunpack.c.l.b16 %v453
        %v472 = vunpack.c.h.b16 %v452
        %v473 = vunpack.c.h.b16 %v453
        %v474 = vunpack.c.l.b16 %v454
        %v475 = vunpack.c.l.b16 %v455
        %v476 = vunpack.c.h.b16 %v454
        %v477 = vunpack.c.h.b16 %v455
        %v478 = vunpack.c.l.b16 %v456
        %v479 = vunpack.c.l.b16 %v457
        %v480 = vunpack.c.h.b16 %v456
        %v481 = vunpack.c.h.b16 %v457
        %v482 = vpack.c.b16 %v467, %v466
        %v483 = vpack.c.b16 %v469, %v468
        %v484 = vpack.c.b16 %v471, %v470
        %v485 = vpack.c.b16 %v473, %v472
        %v486 = vpack.c.b16 %v475, %v474
        %v487 = vpack.c.b16 %v477, %v476
        %v488 = vpack.c.b16 %v479, %v478
        %v489 = vpack.c.b16 %v481, %v480
        %498 = vst [vmem:[%s188] sm:$0xff] %v482
        %499 = vst [vmem:[%s188 + $0x8] sm:$0xff] %v483
        %500 = vst [vmem:[%s188 + $0x10] sm:$0xff] %v484
        %501 = vst [vmem:[%s188 + $0x18] sm:$0xff] %v485
        %502 = vst [vmem:[%s188 + $0x20] sm:$0xff] %v486
        %503 = vst [vmem:[%s188 + $0x28] sm:$0xff] %v487
        %504 = vst [vmem:[%s188 + $0x30] sm:$0xff] %v488
        %505 = vst [vmem:[%s188 + $0x38] sm:$0xff] %v489
        %s506 = sand.u32 %s109, 1
        %s507 = scalar_lea.sflag [#allocation3], %s506
        %s508 = sand.u32 %s109, 1
        %s509 = smul.addr %s508, 64
        %s510 = scalar_lea.vmem [#allocation2], %s509
        // Predicated region
        $region33: #{tpu_custom_call.1} parent=31 // pred_check
          %p511 = pneg %p119
        $region34: #{tpu_custom_call.1} parent=31 // pred_check_branch
          %513 = sbr.rel (%p511) target = $region36
        $region35: #{tpu_custom_call.1} parent=31 // pred_region
          %s514 = smul.u32 2, %s22
          %s516 = ssub.s32 1024, 1024
          %517 = vsyncadd %s507, %s516
          %s518 = smul.addr %s21, 16
          %s519 = sadd.s32 %s514, %s518
          %s520 = smul.addr %s519, 64
          %s521 = scalar_lea.hbm %s3, %s520
          %s522 = sshll.u32 %s510, 4
          %s523 = int_to_ptr.vmem [resolvable:$true] %s522
          %528 = dma.vmem_to_hbm [thread:$0]  %s523, 1024, %s521, %s507, 128, 128, 8
        $region36: #{tpu_custom_call.1} parent=31 // pred_fallthru
          _
      $region32: #{tpu_custom_call.1} parent=5 // pred_fallthru
        _
      %p529 = scmp.le.s32.totalorder 2, %s12
      // Predicated region
      $region37: #{tpu_custom_call.1} parent=5 // pred_check
        %p530 = pneg %p529
      $region38: #{tpu_custom_call.1} parent=5 // pred_check_branch
        %532 = sbr.rel (%p530) target = $region40
      $region39: #{tpu_custom_call.1} parent=5 // pred_region
        %s533 = ssub.s32 %s12, 2
        // Predicated region
        $region41: #{tpu_custom_call.1} parent=39 // pred_check
          %p534 = pneg %p125
        $region42: #{tpu_custom_call.1} parent=39 // pred_check_branch
          %536 = sbr.rel (%p534) target = $region44
        $region43: #{tpu_custom_call.1} parent=39 // pred_region
          %s537 = sand.u32 %s110, 1
          %s538 = scalar_lea.sflag [#allocation3], %s537
          %s539 = sand.u32 %s110, 1
          %s540 = smul.addr %s539, 64
          %s541 = scalar_lea.vmem [#allocation2], %s540
          %542 = dma.done %s538, 1024
        $region44: #{tpu_custom_call.1} parent=39 // pred_fallthru
          _
      $region40: #{tpu_custom_call.1} parent=5 // pred_fallthru
        _
    $region6: #{tpu_custom_call.1} parent=1 // loop_footer
      %s16 = sadd.s32 1, %s12
    $region7: #{tpu_custom_call.1} parent=1 // loop_footer_branch
      %11 = sbr.rel target = $region3
    $region8: #{tpu_custom_call.1} parent=1 // loop_exit
      _
    %543 = vsyncpa [#allocation3], 1
    %s544 = scalar_lea.sflag [#allocation3], 1
    %545 = vsyncpa %s544, 1

</llo_original>
